<compile_context>
chip_gen: v7x
topology: tpu7x:2x2x1
jax: 0.10.0
libtpu: 0.0.40
codegen_flags: <defaults>
</compile_context>

<pallas_src>
import numpy as np
import jax
import jax.numpy as jnp
from jax import lax
from jax.experimental import pallas as pl
from jax.experimental.pallas import tpu as pltpu


# ----------------------------------------------------------------------------
# Mask construction (faithful port of MaskedConv2d.__init__)
# ----------------------------------------------------------------------------
def make_mask(weight_shape, mask_type, mask_n_channels, gated):
    """weight_shape is the PyTorch conv weight shape (Co, Ci, Kh, Kw)."""
    co, ci, kh, kw = weight_shape
    center_row = kh // 2
    center_col = kw // 2
    mask = np.ones(weight_shape, dtype=np.float32)
    if center_row == 0:
        mask[:, :, :, center_col + 1:] = 0
    elif center_col == 0:
        mask[:, :, center_row + 1:, :] = 0
    else:
        mask[:, :, center_row + 1:, :] = 0
        mask[:, :, center_row, center_col + 1:] = 0
    for i in range(mask_n_channels):
        for j in range(mask_n_channels):
            if (mask_type == 'a' and i >= j) or (mask_type == 'b' and i > j):
                mask[j::mask_n_channels, i::mask_n_channels,
                     center_row, center_col] = 0
    if mask_type == 'vstack':
        mask[:, :, center_row, :] = 0
    if gated:
        half = mask[: co // 2]
        mask = np.concatenate([half, half], axis=0)  # == chunk(2,0)[0].repeat(2,...)
    return mask


# ----------------------------------------------------------------------------
# Pallas kernel: full gated-residual forward for one lane tile of pixels.
# Every tensor is (channels, pixels); pixels live on the lane axis.
# ----------------------------------------------------------------------------
def make_kernel(CO, HW, Nb, residual):
    TWO = 2 * CO

    def kernel(cols_v_ref, cols_h_ref, xh_ref, proj_ref,
               wv_ref, wh_ref, w2h_ref, wh2h_ref, b_ref, out_ref):
        f32 = jnp.float32
        T = out_ref.shape[1]

        def mm(w, x):
            return jnp.dot(w, x, preferred_element_type=f32)

        # all biases packed as columns of a single (2*CO, 4) array
        b_all = b_ref[...]
        bv, bh, b2h = b_all[:, 0:1], b_all[:, 1:2], b_all[:, 2:3]
        bh2h = b_all[:CO, 3:4]

        # Per-pixel conditional projection rebuilt from the tiny (2*CO, N)
        # table: onehot[n, p] = 1 iff global pixel p belongs to image n.
        # Built with iota + range compares (no vector integer division); padded
        # pixels fall outside every image range and get zero projection.
        start = pl.program_id(0) * T
        pix = start + lax.broadcasted_iota(jnp.int32, (Nb, T), 1)
        img = lax.broadcasted_iota(jnp.int32, (Nb, T), 0)
        lo = img * HW
        onehot = ((pix >= lo) & (pix < lo + HW)).astype(f32)          # (N, T)
        proj = mm(proj_ref[...], onehot)                              # (2CO, T)

        # vertical-stack KxK masked conv: ONE im2col matmul for both gate
        # halves; bf16 cols are up-cast in VMEM, accumulation is f32.
        v_pre = mm(wv_ref[...], cols_v_ref[...].astype(f32)) + bv     # (2CO, T)
        out_v = jnp.tanh(v_pre[:CO]) * jax.nn.sigmoid(v_pre[CO:])     # (CO, T)

        # 1x1 v->h conv + conditional projection
        v2h = mm(w2h_ref[...], v_pre) + b2h + proj                    # (2CO, T)

        # horizontal-stack 1xK masked conv + v2h + proj.  proj is intentionally
        # added twice (once inside v2h, once here), matching the reference:
        # x_h_out = h(x_h) + x_v2h + proj_y.
        h_pre = mm(wh_ref[...], cols_h_ref[...].astype(f32)) + bh + v2h + proj
        h_g = jnp.tanh(h_pre[:CO]) * jax.nn.sigmoid(h_pre[CO:])       # (CO, T)

        # 1x1 h->h conv (+ residual only when in_channels == out_channels;
        # the residual input stays f32 so this path is exact).
        out_h = mm(wh2h_ref[...], h_g) + bh2h                         # (CO, T)
        if residual:
            out_h = out_h + xh_ref[...]

        # single native 8-sublane x T-lane store
        out_ref[...] = jnp.concatenate([out_v, out_h], axis=0)        # (2CO, T)

    return kernel


# ----------------------------------------------------------------------------
# Parameter construction & host-side re-layout
# ----------------------------------------------------------------------------
def init_params(key, C, CO, K, n_cond, mask_n, mask_type):
    """Torch-layout parameters; masked conv weights are pre-multiplied by mask."""
    TWO = 2 * CO
    ks = jax.random.split(key, 6)

    def rnd(k, shape):
        return np.asarray(0.1 * jax.random.normal(k, shape, jnp.float32))

    wv = rnd(ks[0], (TWO, C, K, K)) * make_mask((TWO, C, K, K), 'vstack', mask_n, True)
    wh = rnd(ks[1], (TWO, C, 1, K)) * make_mask((TWO, C, 1, K), mask_type, mask_n, True)
    wv2h = rnd(ks[2], (TWO, TWO, 1, 1)) * make_mask((TWO, TWO, 1, 1), mask_type, mask_n, True)
    wh2h = rnd(ks[3], (CO, CO, 1, 1)) * make_mask((CO, CO, 1, 1), mask_type, mask_n, False)
    return dict(
        wv=wv, bv=np.zeros(TWO, np.float32),   # conv biases zero-init'd (nn.init.constant_)
        wh=wh, bh=np.zeros(TWO, np.float32),
        wv2h=wv2h, bv2h=np.zeros(TWO, np.float32),
        wh2h=wh2h, bh2h=np.zeros(CO, np.float32),
        w_proj=rnd(ks[4], (TWO, n_cond)), b_proj=rnd(ks[5], (TWO,)),
    )


def _kernel_params(tp, C, CO, K):
    """Host-side re-layout: flatten conv taps into im2col weights (gate halves
    kept merged as 2*CO output rows) and pack all biases into one array."""
    TWO = 2 * CO
    # column index = (dy*K + dx)*C + c  (matches the im2col rows built below)
    wv = np.transpose(tp['wv'], (0, 2, 3, 1)).reshape(TWO, K * K * C)
    # column index = dx*C + c
    wh = np.transpose(tp['wh'][:, :, 0, :], (0, 2, 1)).reshape(TWO, K * C)
    w2h = tp['wv2h'][:, :, 0, 0]                 # (2CO, 2CO)
    wh2h = tp['wh2h'][:, :, 0, 0]                # (CO, CO)
    b_all = np.zeros((TWO, 4), np.float32)
    b_all[:, 0] = tp['bv']
    b_all[:, 1] = tp['bh']
    b_all[:, 2] = tp['bv2h']
    b_all[:CO, 3] = tp['bh2h']
    to = lambda a: jnp.asarray(a, jnp.float32)
    return to(wv), to(wh), to(w2h), to(wh2h), to(b_all)


# ----------------------------------------------------------------------------
# Tile-size selection
# ----------------------------------------------------------------------------
def _round_up(x, m):
    return ((x + m - 1) // m) * m


def _cdiv(a, b):
    return -(-a // b)


def _choose_tile(NHW, m_tile):
    # Lane tiles must be multiples of 128.  Cap at 16384 f32 pixels so the
    # double-buffered working set (~0.2 KB/pixel with bf16 im2col) stays far
    # under v7x's 64 MiB physical / 32 MiB default-scoped VMEM, and keep at
    # least 2 tiles (when NHW allows) so ("parallel",) can shard across v7x's
    # two TensorCores.
    m_tile = int(min(max(int(m_tile), 128), 16384)) // 128 * 128
    if NHW > 128:
        m_tile = min(m_tile, _round_up(_cdiv(NHW, 2), 128))
    else:
        m_tile = 128
    return m_tile


# ----------------------------------------------------------------------------
# Forward, flat (C, N*H*W) layout — preferred entry when stacking layers
# ----------------------------------------------------------------------------
def gated_residual_forward_flat(xv_flat, xh_flat, h_cond, torch_params, N, H, W,
                                *, m_tile=8192, activation_dtype=jnp.bfloat16):
    """xv_flat, xh_flat: (C, N*H*W) f32 with pixel index n*H*W + h*W + w.
    Returns (xv_out_flat, xh_out_flat), each (CO, N*H*W) f32."""
    C = xv_flat.shape[0]
    NHW = N * H * W
    HW = H * W
    TWO = torch_params['wv'].shape[0]
    CO = TWO // 2
    K = torch_params['wv'].shape[-1]
    P = K // 2
    residual = (C == CO)

    wv, wh, w2h, wh2h, b_all = _kernel_params(torch_params, C, CO, K)

    # Conditional projection: tiny Linear kept as wrapper glue; only the
    # (2*CO, N) table goes to the kernel (no per-pixel HBM broadcast).
    if h_cond is None:
        proj_small = jnp.zeros((TWO, N), jnp.float32)
    else:
        proj_small = (h_cond @ jnp.asarray(torch_params['w_proj']).T
                      + jnp.asarray(torch_params['b_proj'])).T.astype(jnp.float32)

    # ---- im2col patch extraction (zero-FLOP gather), done directly in the
    # (C, N, H, W) layout so no transposes are needed here ----
    # TODO(synk): the in-kernel halo-tap variant (no im2col amplification at
    # all) is a further byte reduction; bf16 im2col already halves it.
    xv = xv_flat.reshape(C, N, H, W)
    xvp = jnp.pad(xv, ((0, 0), (0, 0), (P, P), (P, P)))
    cols_v = jnp.stack([xvp[:, :, dy:dy + H, dx:dx + W]
                        for dy in range(K) for dx in range(K)], axis=0)
    cols_v = cols_v.reshape(K * K * C, NHW)          # col (dy*K+dx)*C + c

    xh = xh_flat.reshape(C, N, H, W)
    xhp = jnp.pad(xh, ((0, 0), (0, 0), (0, 0), (P, P)))
    cols_h = jnp.stack([xhp[:, :, :, dx:dx + W] for dx in range(K)], axis=0)
    cols_h = cols_h.reshape(K * C, NHW)              # col dx*C + c

    # ---- lane-tile the pixel axis; pad to a multiple of the tile ----
    m_tile = _choose_tile(NHW, m_tile)
    NHW_pad = _round_up(NHW, m_tile)
    pad = NHW_pad - NHW
    pad1 = (lambda a: jnp.pad(a, ((0, 0), (0, pad)))) if pad else (lambda a: a)

    # the 9x/3x-amplified im2col inputs go over HBM as bf16 (accumulation f32);
    # the residual x_h stays f32 so the residual add is exact.
    cols_v = pad1(cols_v).astype(activation_dtype)
    cols_h = pad1(cols_h).astype(activation_dtype)
    xh_in = pad1(xh_flat)

    grid = (NHW_pad // m_tile,)

    def tile_spec(rows):
        # NOTE: if a profile shows exposed DMA on cols_v at large tiles, add
        # pipeline_mode=pl.Buffered(3) here (sweep; neutral if already hidden).
        return pl.BlockSpec((rows, m_tile), lambda m: (0, m))

    def rep_spec(arr):
        return pl.BlockSpec(arr.shape, lambda m: (0, 0))

    grid_spec = pltpu.PrefetchScalarGridSpec(
        num_scalar_prefetch=0,
        grid=grid,
        in_specs=[
            tile_spec(K * K * C),     # cols_v  (bf16)
            tile_spec(K * C),         # cols_h  (bf16)
            tile_spec(C),             # x_h residual (f32)
            rep_spec(proj_small),     # (2CO, N) conditional projection table
            rep_spec(wv), rep_spec(wh), rep_spec(w2h), rep_spec(wh2h),
            rep_spec(b_all),
        ],
        out_specs=pl.BlockSpec((TWO, m_tile), lambda m: (0, m)),
    )

    out = pl.pallas_call(
        make_kernel(CO, HW, N, residual),
        grid_spec=grid_spec,
        out_shape=jax.ShapeDtypeStruct((TWO, NHW_pad), jnp.float32),
        compiler_params=pltpu.CompilerParams(
            # lane tiles are independent -> shard across both TCs on v7x;
            # neutral on single-TC v5e/v6e.
            dimension_semantics=("parallel",)),
    )(cols_v, cols_h, xh_in, proj_small, wv, wh, w2h, wh2h, b_all)

    out = out[:, :NHW]
    return out[:CO], out[CO:]


# ----------------------------------------------------------------------------
# NCHW convenience wrapper (module-equivalent interface)
# ----------------------------------------------------------------------------
def gated_residual_forward(x_v, x_h, h_cond, torch_params, *, m_tile=8192,
                           activation_dtype=jnp.bfloat16):
    """x_v, x_h: (N, C, H, W) f32 (NCHW, as in PyTorch). h_cond: (N, n_cond) or None.
    Returns (x_v_out, x_h_out) in NCHW.

    When stacking many GatedResidualLayers, call gated_residual_forward_flat
    directly and keep the (C, N*H*W) activation layout between layers so the
    NCHW<->flat transpose round trip is paid only once at the model boundary."""
    N, C, H, W = x_v.shape
    to_flat = lambda x: x.transpose(1, 0, 2, 3).reshape(C, N * H * W)
    xv_f, xh_f = gated_residual_forward_flat(
        to_flat(x_v), to_flat(x_h), h_cond, torch_params, N, H, W,
        m_tile=m_tile, activation_dtype=activation_dtype)
    CO = xv_f.shape[0]
    from_flat = lambda y: y.reshape(CO, N, H, W).transpose(1, 0, 2, 3)
    return from_flat(xv_f), from_flat(xh_f)


# ----------------------------------------------------------------------------
# Pure-JAX NCHW reference of the PyTorch module (for correctness check only)
# ----------------------------------------------------------------------------
def ref_forward(x_v, x_h, h_cond, tp):
    K = tp['wv'].shape[-1]
    P = K // 2

    def conv(x, w, b, pad):
        y = lax.conv_general_dilated(
            x, jnp.asarray(w), (1, 1), pad,
            dimension_numbers=('NCHW', 'OIHW', 'NCHW'),
            precision=lax.Precision.HIGHEST)
        return y + jnp.asarray(b).reshape(1, -1, 1, 1)

    def gate(x):
        a, g = jnp.split(x, 2, axis=1)
        return jnp.tanh(a) * jax.nn.sigmoid(g)

    if h_cond is None:
        proj_y = 0.0
    else:
        proj_y = (h_cond @ jnp.asarray(tp['w_proj']).T
                  + jnp.asarray(tp['b_proj']))[:, :, None, None]

    xv_pre = conv(x_v, tp['wv'], tp['bv'], [(P, P), (P, P)])
    xv2h = conv(xv_pre, tp['wv2h'], tp['bv2h'], [(0, 0), (0, 0)]) + proj_y
    xv_out = gate(xv_pre)
    xh_pre = conv(x_h, tp['wh'], tp['bh'], [(0, 0), (P, P)]) + xv2h + proj_y
    xh_out = conv(gate(xh_pre), tp['wh2h'], tp['bh2h'], [(0, 0), (0, 0)])
    if x_v.shape[1] == tp['wh2h'].shape[0]:   # residual iff in_ch == out_ch
        xh_out = xh_out + x_h
    return xv_out, xh_out


# ----------------------------------------------------------------------------
if __name__ == "__main__":
    # Module-consistent config: in_channels == out_channels == 4 (residual on),
    # kernel_size=3, mask_type='b', mask_n_channels=2, n_cond_classes=10,
    # norm_layer=None.
    # TODO(synk): norm_layer=BatchNorm2d branch not implemented (norm_layer=None here).
    N, C, H, W = 2, 4, 16, 16
    CO, K, MASK_N, NCOND = 4, 3, 2, 10
    MASK_TYPE = 'b'

    key = jax.random.PRNGKey(0)
    kx = jax.random.split(key, 4)
    x_v = jax.random.normal(kx[0], (N, C, H, W), jnp.float32)
    x_h = jax.random.normal(kx[1], (N, C, H, W), jnp.float32)
    h_cond = jax.random.normal(kx[2], (N, NCOND), jnp.float32)

    tp = init_params(kx[3], C, CO, K, NCOND, MASK_N, MASK_TYPE)

    xv_ref, xh_ref = ref_forward(x_v, x_h, h_cond, tp)

    # 1) f32-activation path: checks structural exactness of the kernel.
    fwd_f32 = jax.jit(lambda a, b, c: gated_residual_forward(
        a, b, c, tp, activation_dtype=jnp.float32))
    xv32, xh32 = fwd_f32(x_v, x_h, h_cond)
    jax.block_until_ready((xv32, xh32))
    assert np.allclose(np.asarray(xv32), np.asarray(xv_ref), rtol=1e-4, atol=1e-4)
    assert np.allclose(np.asarray(xh32), np.asarray(xh_ref), rtol=1e-4, atol=1e-4)

    # 2) default (performance) path: bf16 im2col activations, f32 accumulate,
    #    f32 residual.  Looser tolerance reflects the bf16 activation cast.
    fwd = jax.jit(lambda a, b, c: gated_residual_forward(a, b, c, tp))
    xv_out, xh_out = fwd(x_v, x_h, h_cond)
    jax.block_until_ready((xv_out, xh_out))
    assert np.allclose(np.asarray(xv_out), np.asarray(xv_ref), rtol=2e-2, atol=2e-2)
    assert np.allclose(np.asarray(xh_out), np.asarray(xh_ref), rtol=2e-2, atol=2e-2)

    print("KERNEL_OK")
</pallas_src>

<mosaic_0001>
module attributes {stable_mosaic.version = 11 : i64} {
  func.func @kernel(%arg0: i32, %arg1: memref<36x256xf32, #tpu.memory_space<vmem>>, %arg2: memref<12x256xf32, #tpu.memory_space<vmem>>, %arg3: memref<4x256xf32, #tpu.memory_space<vmem>>, %arg4: memref<8x2xf32, #tpu.memory_space<vmem>>, %arg5: memref<8x36xf32, #tpu.memory_space<vmem>>, %arg6: memref<8x12xf32, #tpu.memory_space<vmem>>, %arg7: memref<8x8xf32, #tpu.memory_space<vmem>>, %arg8: memref<4x4xf32, #tpu.memory_space<vmem>>, %arg9: memref<8x4xf32, #tpu.memory_space<vmem>>, %arg10: memref<8x256xf32, #tpu.memory_space<vmem>>) attributes {dimension_semantics = [#tpu.dimension_semantics<parallel>], iteration_bounds = array<i64: 2>, scalar_prefetch = 0 : i64, scratch_operands = 0 : i64, tpu.core_type = #tpu.core_type<tc>, window_params = [{transform_indices = @transform_0, window_bounds = array<i64: 36, 256>}, {transform_indices = @transform_1, window_bounds = array<i64: 12, 256>}, {transform_indices = @transform_2, window_bounds = array<i64: 4, 256>}, {pipeline_mode = #tpu.pipeline_mode<synchronous>, transform_indices = @transform_3, window_bounds = array<i64: 8, 2>}, {pipeline_mode = #tpu.pipeline_mode<synchronous>, transform_indices = @transform_4, window_bounds = array<i64: 8, 36>}, {pipeline_mode = #tpu.pipeline_mode<synchronous>, transform_indices = @transform_5, window_bounds = array<i64: 8, 12>}, {pipeline_mode = #tpu.pipeline_mode<synchronous>, transform_indices = @transform_6, window_bounds = array<i64: 8, 8>}, {pipeline_mode = #tpu.pipeline_mode<synchronous>, transform_indices = @transform_7, window_bounds = array<i64: 4, 4>}, {pipeline_mode = #tpu.pipeline_mode<synchronous>, transform_indices = @transform_8, window_bounds = array<i64: 8, 4>}, {transform_indices = @transform_9, window_bounds = array<i64: 8, 256>}]} {
    %c0 = arith.constant 0 : index
    %c0_0 = arith.constant 0 : index
    %0 = vector.load %arg9[%c0, %c0_0] : memref<8x4xf32, #tpu.memory_space<vmem>>, vector<8x4xf32>
    %1 = vector.extract_strided_slice %0 {offsets = [0, 0], sizes = [8, 1], strides = [1, 1]} : vector<8x4xf32> to vector<8x1xf32>
    %2 = vector.extract_strided_slice %0 {offsets = [0, 1], sizes = [8, 1], strides = [1, 1]} : vector<8x4xf32> to vector<8x1xf32>
    %3 = vector.extract_strided_slice %0 {offsets = [0, 2], sizes = [8, 1], strides = [1, 1]} : vector<8x4xf32> to vector<8x1xf32>
    %4 = vector.extract_strided_slice %0 {offsets = [0, 3], sizes = [4, 1], strides = [1, 1]} : vector<8x4xf32> to vector<4x1xf32>
    %c256_i32 = arith.constant 256 : i32
    %5 = arith.muli %arg0, %c256_i32 : i32
    %6 = tpu.iota {dimensions = array<i32: 1>} : vector<2x256xi32>
    %7 = vector.broadcast %5 : i32 to vector<2x256xi32>
    %8 = arith.addi %7, %6 : vector<2x256xi32>
    %9 = tpu.iota {dimensions = array<i32: 0>} : vector<2x256xi32>
    %c256_i32_1 = arith.constant 256 : i32
    %10 = vector.broadcast %c256_i32_1 : i32 to vector<2x256xi32>
    %11 = arith.muli %9, %10 : vector<2x256xi32>
    %12 = arith.cmpi sge, %8, %11 : vector<2x256xi32>
    %c256_i32_2 = arith.constant 256 : i32
    %13 = vector.broadcast %c256_i32_2 : i32 to vector<2x256xi32>
    %14 = arith.addi %11, %13 : vector<2x256xi32>
    %15 = arith.cmpi slt, %8, %14 : vector<2x256xi32>
    %16 = arith.andi %12, %15 : vector<2x256xi1>
    %17 = arith.extui %16 : vector<2x256xi1> to vector<2x256xi32>
    %18 = arith.sitofp %17 : vector<2x256xi32> to vector<2x256xf32>
    %c0_3 = arith.constant 0 : index
    %c0_4 = arith.constant 0 : index
    %19 = vector.load %arg4[%c0_3, %c0_4] : memref<8x2xf32, #tpu.memory_space<vmem>>, vector<8x2xf32>
    %cst = arith.constant dense<0.000000e+00> : vector<8x256xf32>
    %20 = tpu.matmul %19, %18, %cst {dimension_numbers = #tpu.dot_dimension_numbers<[1], [0], [0], [1], [0, 0, 1, 1], [], []>} : vector<8x2xf32>, vector<2x256xf32>, vector<8x256xf32> -> vector<8x256xf32>
    %c0_5 = arith.constant 0 : index
    %c0_6 = arith.constant 0 : index
    %21 = vector.load %arg5[%c0_5, %c0_6] : memref<8x36xf32, #tpu.memory_space<vmem>>, vector<8x36xf32>
    %c0_7 = arith.constant 0 : index
    %c0_8 = arith.constant 0 : index
    %22 = vector.load %arg1[%c0_7, %c0_8] : memref<36x256xf32, #tpu.memory_space<vmem>>, vector<36x256xf32>
    %cst_9 = arith.constant dense<0.000000e+00> : vector<8x256xf32>
    %23 = tpu.matmul %21, %22, %cst_9 {dimension_numbers = #tpu.dot_dimension_numbers<[1], [0], [0], [1], [0, 0, 1, 1], [], []>} : vector<8x36xf32>, vector<36x256xf32>, vector<8x256xf32> -> vector<8x256xf32>
    %24 = vector.broadcast %1 : vector<8x1xf32> to vector<8x256xf32>
    %25 = arith.addf %23, %24 : vector<8x256xf32>
    %26 = vector.extract_strided_slice %25 {offsets = [0, 0], sizes = [4, 256], strides = [1, 1]} : vector<8x256xf32> to vector<4x256xf32>
    %27 = math.tanh %26 : vector<4x256xf32>
    %28 = vector.extract_strided_slice %25 {offsets = [4, 0], sizes = [4, 256], strides = [1, 1]} : vector<8x256xf32> to vector<4x256xf32>
    %29 = arith.negf %28 : vector<4x256xf32>
    %30 = math.exp %29 : vector<4x256xf32>
    %cst_10 = arith.constant 1.000000e+00 : f32
    %31 = vector.broadcast %cst_10 : f32 to vector<4x256xf32>
    %32 = arith.addf %31, %30 : vector<4x256xf32>
    %33 = arith.divf %31, %32 : vector<4x256xf32>
    %34 = arith.mulf %27, %33 : vector<4x256xf32>
    %c0_11 = arith.constant 0 : index
    %c0_12 = arith.constant 0 : index
    %35 = vector.load %arg7[%c0_11, %c0_12] : memref<8x8xf32, #tpu.memory_space<vmem>>, vector<8x8xf32>
    %cst_13 = arith.constant dense<0.000000e+00> : vector<8x256xf32>
    %36 = tpu.matmul %35, %25, %cst_13 {dimension_numbers = #tpu.dot_dimension_numbers<[1], [0], [0], [1], [0, 0, 1, 1], [], []>} : vector<8x8xf32>, vector<8x256xf32>, vector<8x256xf32> -> vector<8x256xf32>
    %37 = vector.broadcast %3 : vector<8x1xf32> to vector<8x256xf32>
    %38 = arith.addf %36, %37 : vector<8x256xf32>
    %39 = arith.addf %38, %20 : vector<8x256xf32>
    %c0_14 = arith.constant 0 : index
    %c0_15 = arith.constant 0 : index
    %40 = vector.load %arg6[%c0_14, %c0_15] : memref<8x12xf32, #tpu.memory_space<vmem>>, vector<8x12xf32>
    %c0_16 = arith.constant 0 : index
    %c0_17 = arith.constant 0 : index
    %41 = vector.load %arg2[%c0_16, %c0_17] : memref<12x256xf32, #tpu.memory_space<vmem>>, vector<12x256xf32>
    %cst_18 = arith.constant dense<0.000000e+00> : vector<8x256xf32>
    %42 = tpu.matmul %40, %41, %cst_18 {dimension_numbers = #tpu.dot_dimension_numbers<[1], [0], [0], [1], [0, 0, 1, 1], [], []>} : vector<8x12xf32>, vector<12x256xf32>, vector<8x256xf32> -> vector<8x256xf32>
    %43 = vector.broadcast %2 : vector<8x1xf32> to vector<8x256xf32>
    %44 = arith.addf %42, %43 : vector<8x256xf32>
    %45 = arith.addf %44, %39 : vector<8x256xf32>
    %46 = arith.addf %45, %20 : vector<8x256xf32>
    %47 = vector.extract_strided_slice %46 {offsets = [0, 0], sizes = [4, 256], strides = [1, 1]} : vector<8x256xf32> to vector<4x256xf32>
    %48 = math.tanh %47 : vector<4x256xf32>
    %49 = vector.extract_strided_slice %46 {offsets = [4, 0], sizes = [4, 256], strides = [1, 1]} : vector<8x256xf32> to vector<4x256xf32>
    %50 = arith.negf %49 : vector<4x256xf32>
    %51 = math.exp %50 : vector<4x256xf32>
    %cst_19 = arith.constant 1.000000e+00 : f32
    %52 = vector.broadcast %cst_19 : f32 to vector<4x256xf32>
    %53 = arith.addf %52, %51 : vector<4x256xf32>
    %54 = arith.divf %52, %53 : vector<4x256xf32>
    %55 = arith.mulf %48, %54 : vector<4x256xf32>
    %c0_20 = arith.constant 0 : index
    %c0_21 = arith.constant 0 : index
    %56 = vector.load %arg8[%c0_20, %c0_21] : memref<4x4xf32, #tpu.memory_space<vmem>>, vector<4x4xf32>
    %cst_22 = arith.constant dense<0.000000e+00> : vector<4x256xf32>
    %57 = tpu.matmul %56, %55, %cst_22 {dimension_numbers = #tpu.dot_dimension_numbers<[1], [0], [0], [1], [0, 0, 1, 1], [], []>} : vector<4x4xf32>, vector<4x256xf32>, vector<4x256xf32> -> vector<4x256xf32>
    %58 = vector.broadcast %4 : vector<4x1xf32> to vector<4x256xf32>
    %59 = arith.addf %57, %58 : vector<4x256xf32>
    %c0_23 = arith.constant 0 : index
    %c0_24 = arith.constant 0 : index
    %60 = vector.load %arg3[%c0_23, %c0_24] : memref<4x256xf32, #tpu.memory_space<vmem>>, vector<4x256xf32>
    %61 = arith.addf %59, %60 : vector<4x256xf32>
    %62 = tpu.concatenate %34, %61 in 0 : vector<4x256xf32>, vector<4x256xf32> -> vector<8x256xf32>
    %c0_25 = arith.constant 0 : index
    %c0_26 = arith.constant 0 : index
    %63 = vector.load %arg10[%c0_25, %c0_26] : memref<8x256xf32, #tpu.memory_space<vmem>>, vector<8x256xf32>
    tpu.vector_store %arg10[%c0_25, %c0_26], %62 {strides = array<i32>} : memref<8x256xf32, #tpu.memory_space<vmem>>, vector<8x256xf32>,
    return
  }
  func.func @transform_0(%arg0: i32) -> (i32, i32) {
    %c0_i32 = arith.constant 0 : i32
    %c0_i32_0 = arith.constant 0 : i32
    return %c0_i32, %arg0 : i32, i32
  }
  func.func @transform_1(%arg0: i32) -> (i32, i32) {
    %c0_i32 = arith.constant 0 : i32
    %c0_i32_0 = arith.constant 0 : i32
    return %c0_i32, %arg0 : i32, i32
  }
  func.func @transform_2(%arg0: i32) -> (i32, i32) {
    %c0_i32 = arith.constant 0 : i32
    %c0_i32_0 = arith.constant 0 : i32
    return %c0_i32, %arg0 : i32, i32
  }
  func.func @transform_3(%arg0: i32) -> (i32, i32) {
    %c0_i32 = arith.constant 0 : i32
    %c0_i32_0 = arith.constant 0 : i32
    %c0_i32_1 = arith.constant 0 : i32
    return %c0_i32, %c0_i32_0 : i32, i32
  }
  func.func @transform_4(%arg0: i32) -> (i32, i32) {
    %c0_i32 = arith.constant 0 : i32
    %c0_i32_0 = arith.constant 0 : i32
    %c0_i32_1 = arith.constant 0 : i32
    return %c0_i32, %c0_i32_0 : i32, i32
  }
  func.func @transform_5(%arg0: i32) -> (i32, i32) {
    %c0_i32 = arith.constant 0 : i32
    %c0_i32_0 = arith.constant 0 : i32
    %c0_i32_1 = arith.constant 0 : i32
    return %c0_i32, %c0_i32_0 : i32, i32
  }
  func.func @transform_6(%arg0: i32) -> (i32, i32) {
    %c0_i32 = arith.constant 0 : i32
    %c0_i32_0 = arith.constant 0 : i32
    %c0_i32_1 = arith.constant 0 : i32
    return %c0_i32, %c0_i32_0 : i32, i32
  }
  func.func @transform_7(%arg0: i32) -> (i32, i32) {
    %c0_i32 = arith.constant 0 : i32
    %c0_i32_0 = arith.constant 0 : i32
    %c0_i32_1 = arith.constant 0 : i32
    return %c0_i32, %c0_i32_0 : i32, i32
  }
  func.func @transform_8(%arg0: i32) -> (i32, i32) {
    %c0_i32 = arith.constant 0 : i32
    %c0_i32_0 = arith.constant 0 : i32
    %c0_i32_1 = arith.constant 0 : i32
    return %c0_i32, %c0_i32_0 : i32, i32
  }
  func.func @transform_9(%arg0: i32) -> (i32, i32) {
    %c0_i32 = arith.constant 0 : i32
    %c0_i32_0 = arith.constant 0 : i32
    return %c0_i32, %arg0 : i32, i32
  }
}

</mosaic_0001>

<llo_original>
// kernel: _lambda_.1
$region0: #{_lambda_.1}
  #allocation0 [shape = 'u32[]', space=smem, size = 0x4, offset = 0x4, fixed_abs, tag = 'smem constant byte address 0x4 - core index']
  #allocation1 [shape = 'u32[144,128]{1,0:T(1,128)}', space=vmem, size = 0x12000, scoped, tag = 'internal scratch']
  %s0 = inlined_call_operand.vmem [shape: f32[36,512], index: 0, kind: input, shape index: {}]
  %s1 = inlined_call_operand.vmem [shape: f32[12,512], index: 1, kind: input, shape index: {}]
  %s2 = inlined_call_operand.vmem [shape: f32[4,512], index: 2, kind: input, shape index: {}]
  %s3 = inlined_call_operand.vmem [shape: f32[8,2], index: 3, kind: input, shape index: {}]
  %s4 = inlined_call_operand.vmem [shape: f32[8,36], index: 4, kind: input, shape index: {}]
  %s5 = inlined_call_operand.vmem [shape: f32[8,12], index: 5, kind: input, shape index: {}]
  %s6 = inlined_call_operand.vmem [shape: f32[8,8], index: 6, kind: input, shape index: {}]
  %s7 = inlined_call_operand.vmem [shape: f32[4,4], index: 7, kind: input, shape index: {}]
  %s8 = inlined_call_operand.vmem [shape: f32[8,4], index: 8, kind: input, shape index: {}]
  %s9 = inlined_call_operand.vmem [shape: f32[8,512], index: 9, kind: output, shape index: {}]
  %s10 = sld [smem:[#allocation0]]
  $region115: #{_lambda_.1} parent=0
    _
  %s12 = ssub.s32 1, %s10
  %s13 = scalar_select 0, %s12, %s10
  $region1: #{_lambda_.1} parent=0
    #allocation2 [shape = 'u8[81920]{0}', space=vmem, size = 0x14000, scoped, tag = 'input window, operand 0']
    #allocation3 [shape = 'u8[32768]{0}', space=vmem, size = 0x8000, scoped, tag = 'input window, operand 1']
    loop: start=0, step=1, limit=4
    $region2: #{_lambda_.1} parent=1 // loop_pre_header
      _
    $region3: #{_lambda_.1} parent=1 // loop_header
      %s15 = sphi 0, %s19
      %p16 = scmp.ge.s32.totalorder %s15, 4
      %s25 = sphi 0, %s27
      %s28 = sphi 0, %s25
      %s29 = sphi 0, %s28
      %s45 = sphi 0, %s29
      %s51 = sphi 0, %s53
      %s54 = sphi 0, %s51
      %s55 = sphi 0, %s54
      %s71 = sphi 0, %s55
      %s77 = sphi 0, %s79
      %s80 = sphi 0, %s77
      %s81 = sphi 0, %s80
      %s97 = sphi 0, %s81
      %s101 = sphi 0, %s101
      %s103 = sphi 0, %s101
      %s104 = sphi 0, %s103
      %s118 = sphi 0, %s104
      %s122 = sphi 0, %s122
      %s124 = sphi 0, %s122
      %s125 = sphi 0, %s124
      %s139 = sphi 0, %s125
      %s143 = sphi 0, %s143
      %s145 = sphi 0, %s143
      %s146 = sphi 0, %s145
      %s160 = sphi 0, %s146
      %s164 = sphi 0, %s164
      %s166 = sphi 0, %s164
      %s167 = sphi 0, %s166
      %s181 = sphi 0, %s167
      %s185 = sphi 0, %s185
      %s187 = sphi 0, %s185
      %s188 = sphi 0, %s187
      %s202 = sphi 0, %s188
      %s206 = sphi 0, %s206
      %s208 = sphi 0, %s206
      %s209 = sphi 0, %s208
      %s223 = sphi 0, %s209
      %s229 = sphi 0, %s231
      %s232 = sphi 0, %s229
      %s233 = sphi 0, %s232
      %s249 = sphi 0, %s233
    $region4: #{_lambda_.1} parent=1 // loop_header_branch
      %18 = sbr.rel (%p16) target = $region8
    $region5: #{_lambda_.1} parent=1 // loop_body
      %s20 = ssub.s32 %s15, 1
      %s21 = ssub.s32 %s15, 2
      %s22 = sadd.s32 %s15, 1
      %s23 = ssub.s32 %s15, %s22
      %p24 = scmp.eq.s32.totalorder %s23, 0
      %s26 = sadd.s32 %s25, 1
      %s27 = scalar_select %p24, %s25, %s26
      %p30 = pneg %p24
      %p31 = scmp.eq.s32.totalorder %s15, 1
      %p32 = por %p30, %p31
      %p33 = scmp.ne.s32.totalorder %s25, %s28
      %p34 = scmp.eq.s32.totalorder %s15, 0
      %p35 = por %p33, %p34
      %p36 = scmp.ne.s32.totalorder %s25, %s28
      %p37 = scmp.eq.s32.totalorder %s20, 1
      %p38 = por %p36, %p37
      %p39 = scmp.ne.s32.totalorder %s28, %s29
      %p40 = scmp.eq.s32.totalorder %s20, 0
      %p41 = por %p39, %p40
      %p42 = scmp.ne.s32.totalorder %s28, %s29
      %p43 = scmp.eq.s32.totalorder %s21, 1
      %p44 = por %p42, %p43
      %p46 = scmp.ne.s32.totalorder %s29, %s45
      %p47 = scmp.eq.s32.totalorder %s21, 0
      %p48 = por %p46, %p47
      %s49 = ssub.s32 %s15, %s22
      %p50 = scmp.eq.s32.totalorder %s49, 0
      %s52 = sadd.s32 %s51, 1
      %s53 = scalar_select %p50, %s51, %s52
      %p56 = pneg %p50
      %p57 = scmp.eq.s32.totalorder %s15, 1
      %p58 = por %p56, %p57
      %p59 = scmp.ne.s32.totalorder %s51, %s54
      %p60 = scmp.eq.s32.totalorder %s15, 0
      %p61 = por %p59, %p60
      %p62 = scmp.ne.s32.totalorder %s51, %s54
      %p63 = scmp.eq.s32.totalorder %s20, 1
      %p64 = por %p62, %p63
      %p65 = scmp.ne.s32.totalorder %s54, %s55
      %p66 = scmp.eq.s32.totalorder %s20, 0
      %p67 = por %p65, %p66
      %p68 = scmp.ne.s32.totalorder %s54, %s55
      %p69 = scmp.eq.s32.totalorder %s21, 1
      %p70 = por %p68, %p69
      %p72 = scmp.ne.s32.totalorder %s55, %s71
      %p73 = scmp.eq.s32.totalorder %s21, 0
      %p74 = por %p72, %p73
      %s75 = ssub.s32 %s15, %s22
      %p76 = scmp.eq.s32.totalorder %s75, 0
      %s78 = sadd.s32 %s77, 1
      %s79 = scalar_select %p76, %s77, %s78
      %p82 = pneg %p76
      %p83 = scmp.eq.s32.totalorder %s15, 1
      %p84 = por %p82, %p83
      %p85 = scmp.ne.s32.totalorder %s77, %s80
      %p86 = scmp.eq.s32.totalorder %s15, 0
      %p87 = por %p85, %p86
      %p88 = scmp.ne.s32.totalorder %s77, %s80
      %p89 = scmp.eq.s32.totalorder %s20, 1
      %p90 = por %p88, %p89
      %p91 = scmp.ne.s32.totalorder %s80, %s81
      %p92 = scmp.eq.s32.totalorder %s20, 0
      %p93 = por %p91, %p92
      %p94 = scmp.ne.s32.totalorder %s80, %s81
      %p95 = scmp.eq.s32.totalorder %s21, 1
      %p96 = por %p94, %p95
      %p98 = scmp.ne.s32.totalorder %s81, %s97
      %p99 = scmp.eq.s32.totalorder %s21, 0
      %p100 = por %p98, %p99
      %s102 = sadd.s32 %s101, 1
      %p105 = scmp.eq.s32.totalorder %s15, 1
      %p106 = scmp.ne.s32.totalorder %s101, %s103
      %p107 = scmp.eq.s32.totalorder %s15, 0
      %p108 = por %p106, %p107
      %p109 = scmp.ne.s32.totalorder %s101, %s103
      %p110 = scmp.eq.s32.totalorder %s20, 1
      %p111 = por %p109, %p110
      %p112 = scmp.ne.s32.totalorder %s103, %s104
      %p113 = scmp.eq.s32.totalorder %s20, 0
      %p114 = por %p112, %p113
      %p115 = scmp.ne.s32.totalorder %s103, %s104
      %p116 = scmp.eq.s32.totalorder %s21, 1
      %p117 = por %p115, %p116
      %p119 = scmp.ne.s32.totalorder %s104, %s118
      %p120 = scmp.eq.s32.totalorder %s21, 0
      %p121 = por %p119, %p120
      %s123 = sadd.s32 %s122, 1
      %p126 = scmp.eq.s32.totalorder %s15, 1
      %p127 = scmp.ne.s32.totalorder %s122, %s124
      %p128 = scmp.eq.s32.totalorder %s15, 0
      %p129 = por %p127, %p128
      %p130 = scmp.ne.s32.totalorder %s122, %s124
      %p131 = scmp.eq.s32.totalorder %s20, 1
      %p132 = por %p130, %p131
      %p133 = scmp.ne.s32.totalorder %s124, %s125
      %p134 = scmp.eq.s32.totalorder %s20, 0
      %p135 = por %p133, %p134
      %p136 = scmp.ne.s32.totalorder %s124, %s125
      %p137 = scmp.eq.s32.totalorder %s21, 1
      %p138 = por %p136, %p137
      %p140 = scmp.ne.s32.totalorder %s125, %s139
      %p141 = scmp.eq.s32.totalorder %s21, 0
      %p142 = por %p140, %p141
      %s144 = sadd.s32 %s143, 1
      %p147 = scmp.eq.s32.totalorder %s15, 1
      %p148 = scmp.ne.s32.totalorder %s143, %s145
      %p149 = scmp.eq.s32.totalorder %s15, 0
      %p150 = por %p148, %p149
      %p151 = scmp.ne.s32.totalorder %s143, %s145
      %p152 = scmp.eq.s32.totalorder %s20, 1
      %p153 = por %p151, %p152
      %p154 = scmp.ne.s32.totalorder %s145, %s146
      %p155 = scmp.eq.s32.totalorder %s20, 0
      %p156 = por %p154, %p155
      %p157 = scmp.ne.s32.totalorder %s145, %s146
      %p158 = scmp.eq.s32.totalorder %s21, 1
      %p159 = por %p157, %p158
      %p161 = scmp.ne.s32.totalorder %s146, %s160
      %p162 = scmp.eq.s32.totalorder %s21, 0
      %p163 = por %p161, %p162
      %s165 = sadd.s32 %s164, 1
      %p168 = scmp.eq.s32.totalorder %s15, 1
      %p169 = scmp.ne.s32.totalorder %s164, %s166
      %p170 = scmp.eq.s32.totalorder %s15, 0
      %p171 = por %p169, %p170
      %p172 = scmp.ne.s32.totalorder %s164, %s166
      %p173 = scmp.eq.s32.totalorder %s20, 1
      %p174 = por %p172, %p173
      %p175 = scmp.ne.s32.totalorder %s166, %s167
      %p176 = scmp.eq.s32.totalorder %s20, 0
      %p177 = por %p175, %p176
      %p178 = scmp.ne.s32.totalorder %s166, %s167
      %p179 = scmp.eq.s32.totalorder %s21, 1
      %p180 = por %p178, %p179
      %p182 = scmp.ne.s32.totalorder %s167, %s181
      %p183 = scmp.eq.s32.totalorder %s21, 0
      %p184 = por %p182, %p183
      %s186 = sadd.s32 %s185, 1
      %p189 = scmp.eq.s32.totalorder %s15, 1
      %p190 = scmp.ne.s32.totalorder %s185, %s187
      %p191 = scmp.eq.s32.totalorder %s15, 0
      %p192 = por %p190, %p191
      %p193 = scmp.ne.s32.totalorder %s185, %s187
      %p194 = scmp.eq.s32.totalorder %s20, 1
      %p195 = por %p193, %p194
      %p196 = scmp.ne.s32.totalorder %s187, %s188
      %p197 = scmp.eq.s32.totalorder %s20, 0
      %p198 = por %p196, %p197
      %p199 = scmp.ne.s32.totalorder %s187, %s188
      %p200 = scmp.eq.s32.totalorder %s21, 1
      %p201 = por %p199, %p200
      %p203 = scmp.ne.s32.totalorder %s188, %s202
      %p204 = scmp.eq.s32.totalorder %s21, 0
      %p205 = por %p203, %p204
      %s207 = sadd.s32 %s206, 1
      %p210 = scmp.eq.s32.totalorder %s15, 1
      %p211 = scmp.ne.s32.totalorder %s206, %s208
      %p212 = scmp.eq.s32.totalorder %s15, 0
      %p213 = por %p211, %p212
      %p214 = scmp.ne.s32.totalorder %s206, %s208
      %p215 = scmp.eq.s32.totalorder %s20, 1
      %p216 = por %p214, %p215
      %p217 = scmp.ne.s32.totalorder %s208, %s209
      %p218 = scmp.eq.s32.totalorder %s20, 0
      %p219 = por %p217, %p218
      %p220 = scmp.ne.s32.totalorder %s208, %s209
      %p221 = scmp.eq.s32.totalorder %s21, 1
      %p222 = por %p220, %p221
      %p224 = scmp.ne.s32.totalorder %s209, %s223
      %p225 = scmp.eq.s32.totalorder %s21, 0
      %p226 = por %p224, %p225
      %s227 = ssub.s32 %s15, %s22
      %p228 = scmp.eq.s32.totalorder %s227, 0
      %s230 = sadd.s32 %s229, 1
      %s231 = scalar_select %p228, %s229, %s230
      %p234 = pneg %p228
      %p235 = scmp.eq.s32.totalorder %s15, 1
      %p236 = por %p234, %p235
      %p237 = scmp.ne.s32.totalorder %s229, %s232
      %p238 = scmp.eq.s32.totalorder %s15, 0
      %p239 = por %p237, %p238
      %p240 = scmp.ne.s32.totalorder %s229, %s232
      %p241 = scmp.eq.s32.totalorder %s20, 1
      %p242 = por %p240, %p241
      %p243 = scmp.ne.s32.totalorder %s232, %s233
      %p244 = scmp.eq.s32.totalorder %s20, 0
      %p245 = por %p243, %p244
      %p246 = scmp.ne.s32.totalorder %s232, %s233
      %p247 = scmp.eq.s32.totalorder %s21, 1
      %p248 = por %p246, %p247
      %p250 = scmp.ne.s32.totalorder %s233, %s249
      %p251 = scmp.eq.s32.totalorder %s21, 0
      %p252 = por %p250, %p251
      %p253 = scmp.le.s32.totalorder 1, %s15
      %p254 = scmp.lt.s32.totalorder %s15, 3
      %p255 = pnand %p253, %p254
      %p256 = pneg %p255
      // Predicated region
      $region9: #{_lambda_.1} parent=5 // pred_check
        _
      $region10: #{_lambda_.1} parent=5 // pred_check_branch
        %258 = sbr.rel (%p255) target = $region12
      $region11: #{_lambda_.1} parent=5 // pred_region
        %s259 = ssub.s32 %s15, 1
        // Predicated region
        $region13: #{_lambda_.1} parent=11 // pred_check
          %p260 = pneg %p114
        $region14: #{_lambda_.1} parent=11 // pred_check_branch
          %262 = sbr.rel (%p260) target = $region16
        $region15: #{_lambda_.1} parent=11 // pred_region
          _
        $region16: #{_lambda_.1} parent=11 // pred_fallthru
          _
        // Predicated region
        $region17: #{_lambda_.1} parent=11 // pred_check
          %p263 = pneg %p135
        $region18: #{_lambda_.1} parent=11 // pred_check_branch
          %265 = sbr.rel (%p263) target = $region20
        $region19: #{_lambda_.1} parent=11 // pred_region
          _
        $region20: #{_lambda_.1} parent=11 // pred_fallthru
          _
        // Predicated region
        $region21: #{_lambda_.1} parent=11 // pred_check
          %p266 = pneg %p156
        $region22: #{_lambda_.1} parent=11 // pred_check_branch
          %268 = sbr.rel (%p266) target = $region24
        $region23: #{_lambda_.1} parent=11 // pred_region
          _
        $region24: #{_lambda_.1} parent=11 // pred_fallthru
          _
        // Predicated region
        $region25: #{_lambda_.1} parent=11 // pred_check
          %p269 = pneg %p177
        $region26: #{_lambda_.1} parent=11 // pred_check_branch
          %271 = sbr.rel (%p269) target = $region28
        $region27: #{_lambda_.1} parent=11 // pred_region
          _
        $region28: #{_lambda_.1} parent=11 // pred_fallthru
          _
        // Predicated region
        $region29: #{_lambda_.1} parent=11 // pred_check
          %p272 = pneg %p198
        $region30: #{_lambda_.1} parent=11 // pred_check_branch
          %274 = sbr.rel (%p272) target = $region32
        $region31: #{_lambda_.1} parent=11 // pred_region
          _
        $region32: #{_lambda_.1} parent=11 // pred_fallthru
          _
        // Predicated region
        $region33: #{_lambda_.1} parent=11 // pred_check
          %p275 = pneg %p219
        $region34: #{_lambda_.1} parent=11 // pred_check_branch
          %277 = sbr.rel (%p275) target = $region36
        $region35: #{_lambda_.1} parent=11 // pred_region
          _
        $region36: #{_lambda_.1} parent=11 // pred_fallthru
          _
      $region12: #{_lambda_.1} parent=5 // pred_fallthru
        _
      %p278 = scmp.lt.s32.totalorder %s15, 2
      // Predicated region
      $region37: #{_lambda_.1} parent=5 // pred_check
        %p279 = pneg %p278
      $region38: #{_lambda_.1} parent=5 // pred_check_branch
        %281 = sbr.rel (%p279) target = $region40
      $region39: #{_lambda_.1} parent=5 // pred_region
        // Predicated region
        $region41: #{_lambda_.1} parent=39 // pred_check
          %p282 = pneg %p35
        $region42: #{_lambda_.1} parent=39 // pred_check_branch
          %284 = sbr.rel (%p282) target = $region44
        $region43: #{_lambda_.1} parent=39 // pred_region
          %s285 = sand.u32 %s25, 1
          %s286 = sand.u32 %s25, 1
          %s287 = smul.addr %s286, 80
          %s288 = scalar_lea.vmem [#allocation2], %s287
          %s289 = smul.u32 2, %s15
          %s290 = smul.addr %s289, 8
          %s291 = scalar_lea.vmem %s0, %s290
          // Predicated region
          $region45: #{_lambda_.1} parent=43 // pred_check
            _
          $region46: #{_lambda_.1} parent=43 // pred_check_branch
            %293 = sbr.rel (0) target = $region48
          $region47: #{_lambda_.1} parent=43 // pred_region
            // Predicated region
            $region49: #{_lambda_.1} parent=47 // pred_check
              _
            $region50: #{_lambda_.1} parent=47 // pred_check_branch
              %295 = sbr.rel (0) target = $region52
            $region51: #{_lambda_.1} parent=47 // pred_region
              loop: start=0, step=1, limit=1
              $region53: #{_lambda_.1} parent=51 // loop_pre_header
                _
              $region54: #{_lambda_.1} parent=51 // loop_header
                %s297 = sphi 0, %s301
                %p298 = scmp.ge.s32.totalorder %s297, 1
                %s302 = sphi %s291, %s291
                %s303 = sphi %s288, %s288
              $region55: #{_lambda_.1} parent=51 // loop_header_branch
                %300 = sbr.rel (%p298) target = $region59
              $region56: #{_lambda_.1} parent=51 // loop_body
                %v304 = vld [vmem:[%s302] sm:$0xff]
                %305 = vst [vmem:[%s303] sm:$0xff] %v304
                %v306 = vld [vmem:[%s302 + $0x8] sm:$0xff]
                %307 = vst [vmem:[%s303 + $0x8] sm:$0xff] %v306
                %v308 = vld [vmem:[%s302 + $0x20] sm:$0xff]
                %309 = vst [vmem:[%s303 + $0x10] sm:$0xff] %v308
                %v310 = vld [vmem:[%s302 + $0x28] sm:$0xff]
                %311 = vst [vmem:[%s303 + $0x18] sm:$0xff] %v310
                %v312 = vld [vmem:[%s302 + $0x40] sm:$0xff]
                %313 = vst [vmem:[%s303 + $0x20] sm:$0xff] %v312
                %v314 = vld [vmem:[%s302 + $0x48] sm:$0xff]
                %315 = vst [vmem:[%s303 + $0x28] sm:$0xff] %v314
                %v316 = vld [vmem:[%s302 + $0x60] sm:$0xff]
                %317 = vst [vmem:[%s303 + $0x30] sm:$0xff] %v316
                %v318 = vld [vmem:[%s302 + $0x68] sm:$0xff]
                %319 = vst [vmem:[%s303 + $0x38] sm:$0xff] %v318
                %v320 = vld [vmem:[%s302 + $0x80] sm:$0xff]
                %321 = vst [vmem:[%s303 + $0x40] sm:$0xff] %v320
                %v322 = vld [vmem:[%s302 + $0x88] sm:$0xff]
                %323 = vst [vmem:[%s303 + $0x48] sm:$0xff] %v322
              $region57: #{_lambda_.1} parent=51 // loop_footer
                %s301 = sadd.s32 1, %s297
              $region58: #{_lambda_.1} parent=51 // loop_footer_branch
                %296 = sbr.rel target = $region54
              $region59: #{_lambda_.1} parent=51 // loop_exit
                _
            $region52: #{_lambda_.1} parent=47 // pred_fallthru
              _
            // Predicated region
            $region60: #{_lambda_.1} parent=47 // pred_check
              _
            $region61: #{_lambda_.1} parent=47 // pred_check_branch
              %325 = sbr.rel target = $region63
            $region62: #{_lambda_.1} parent=47 // pred_region
              _
            $region63: #{_lambda_.1} parent=47 // pred_fallthru
              _
          $region48: #{_lambda_.1} parent=43 // pred_fallthru
            _
          %326 = vnop
        $region44: #{_lambda_.1} parent=39 // pred_fallthru
          _
        // Predicated region
        $region64: #{_lambda_.1} parent=39 // pred_check
          %p327 = pneg %p61
        $region65: #{_lambda_.1} parent=39 // pred_check_branch
          %329 = sbr.rel (%p327) target = $region67
        $region66: #{_lambda_.1} parent=39 // pred_region
          %s330 = sand.u32 %s51, 1
          %s331 = sand.u32 %s51, 1
          %s332 = smul.addr %s331, 32
          %s333 = scalar_lea.vmem [#allocation3], %s332
          %s334 = smul.u32 2, %s15
          %s335 = smul.addr %s334, 8
          %s336 = scalar_lea.vmem %s1, %s335
          // Predicated region
          $region68: #{_lambda_.1} parent=66 // pred_check
            _
          $region69: #{_lambda_.1} parent=66 // pred_check_branch
            %338 = sbr.rel (0) target = $region71
          $region70: #{_lambda_.1} parent=66 // pred_region
            // Predicated region
            $region72: #{_lambda_.1} parent=70 // pred_check
              _
            $region73: #{_lambda_.1} parent=70 // pred_check_branch
              %340 = sbr.rel (0) target = $region75
            $region74: #{_lambda_.1} parent=70 // pred_region
              loop: start=0, step=1, limit=1
              $region76: #{_lambda_.1} parent=74 // loop_pre_header
                _
              $region77: #{_lambda_.1} parent=74 // loop_header
                %s342 = sphi 0, %s346
                %p343 = scmp.ge.s32.totalorder %s342, 1
                %s347 = sphi %s336, %s336
                %s348 = sphi %s333, %s333
              $region78: #{_lambda_.1} parent=74 // loop_header_branch
                %345 = sbr.rel (%p343) target = $region82
              $region79: #{_lambda_.1} parent=74 // loop_body
                %v349 = vld [vmem:[%s347] sm:$0xff]
                %350 = vst [vmem:[%s348] sm:$0xff] %v349
                %v351 = vld [vmem:[%s347 + $0x8] sm:$0xff]
                %352 = vst [vmem:[%s348 + $0x8] sm:$0xff] %v351
                %v353 = vld [vmem:[%s347 + $0x20] sm:$0xff]
                %354 = vst [vmem:[%s348 + $0x10] sm:$0xff] %v353
                %v355 = vld [vmem:[%s347 + $0x28] sm:$0xff]
                %356 = vst [vmem:[%s348 + $0x18] sm:$0xff] %v355
              $region80: #{_lambda_.1} parent=74 // loop_footer
                %s346 = sadd.s32 1, %s342
              $region81: #{_lambda_.1} parent=74 // loop_footer_branch
                %341 = sbr.rel target = $region77
              $region82: #{_lambda_.1} parent=74 // loop_exit
                _
            $region75: #{_lambda_.1} parent=70 // pred_fallthru
              _
            // Predicated region
            $region83: #{_lambda_.1} parent=70 // pred_check
              _
            $region84: #{_lambda_.1} parent=70 // pred_check_branch
              %358 = sbr.rel target = $region86
            $region85: #{_lambda_.1} parent=70 // pred_region
              _
            $region86: #{_lambda_.1} parent=70 // pred_fallthru
              _
          $region71: #{_lambda_.1} parent=66 // pred_fallthru
            _
          %359 = vnop
        $region67: #{_lambda_.1} parent=39 // pred_fallthru
          _
        // Predicated region
        $region87: #{_lambda_.1} parent=39 // pred_check
          %p360 = pneg %p87
        $region88: #{_lambda_.1} parent=39 // pred_check_branch
          %362 = sbr.rel (%p360) target = $region90
        $region89: #{_lambda_.1} parent=39 // pred_region
          %s363 = smul.u32 2, %s15
          %p364 = scmp.lt.s32.totalorder %s363, 3
          %s365 = scalar_select %p364, %s363, 3
          %s366 = smul.addr %s365, 4
          %s367 = scalar_lea.vmem %s2, %s366
          %s368 = smul.u32 2, %s15
        $region90: #{_lambda_.1} parent=39 // pred_fallthru
          _
      $region40: #{_lambda_.1} parent=5 // pred_fallthru
        _
      %p369 = scmp.le.s32.totalorder 1, %s15
      %p370 = scmp.lt.s32.totalorder %s15, 3
      %p371 = pnand %p369, %p370
      %p372 = pneg %p371
      // Predicated region
      $region91: #{_lambda_.1} parent=5 // pred_check
        _
      $region92: #{_lambda_.1} parent=5 // pred_check_branch
        %374 = sbr.rel (%p371) target = $region94
      $region93: #{_lambda_.1} parent=5 // pred_region
        %s375 = ssub.s32 %s15, 1
        %s376 = sand.u32 %s28, 1
        %s377 = sand.u32 %s28, 1
        %s378 = smul.addr %s377, 80
        %s379 = scalar_lea.vmem [#allocation2], %s378
        // Predicated region
        $region95: #{_lambda_.1} parent=93 // pred_check
          %p380 = pneg %p41
        $region96: #{_lambda_.1} parent=93 // pred_check_branch
          %382 = sbr.rel (%p380) target = $region98
        $region97: #{_lambda_.1} parent=93 // pred_region
          _
        $region98: #{_lambda_.1} parent=93 // pred_fallthru
          _
        %s383 = sand.u32 %s54, 1
        %s384 = sand.u32 %s54, 1
        %s385 = smul.addr %s384, 32
        %s386 = scalar_lea.vmem [#allocation3], %s385
        // Predicated region
        $region99: #{_lambda_.1} parent=93 // pred_check
          %p387 = pneg %p67
        $region100: #{_lambda_.1} parent=93 // pred_check_branch
          %389 = sbr.rel (%p387) target = $region102
        $region101: #{_lambda_.1} parent=93 // pred_region
          _
        $region102: #{_lambda_.1} parent=93 // pred_fallthru
          _
        %s390 = sand.u32 %s28, 1
        %s391 = sand.u32 %s28, 1
        %s392 = smul.addr %s391, 80
        %s393 = scalar_lea.vmem [#allocation2], %s392
        %p394 = pneg %p41
        %p395 = pneg %p38
        %s396 = sand.u32 %s54, 1
        %s397 = sand.u32 %s54, 1
        %s398 = smul.addr %s397, 32
        %s399 = scalar_lea.vmem [#allocation3], %s398
        %p400 = pneg %p67
        %p401 = pneg %p64
        %s402 = smul.u32 2, %s20
        %p403 = scmp.lt.s32.totalorder %s402, 3
        %s404 = scalar_select %p403, %s402, 3
        %s405 = smul.addr %s404, 4
        %s406 = scalar_lea.vmem %s2, %s405
        %p407 = pneg %p93
        %p408 = pneg %p90
        %p409 = pneg %p114
        %p410 = pneg %p111
        %p411 = pneg %p135
        %p412 = pneg %p132
        %p413 = pneg %p156
        %p414 = pneg %p153
        %p415 = pneg %p177
        %p416 = pneg %p174
        %p417 = pneg %p198
        %p418 = pneg %p195
        %p419 = pneg %p219
        %p420 = pneg %p216
        %p421 = pneg %p245
        %p422 = pneg %p242
        %s423 = smul.u32 2, %s20
        %p424 = scmp.lt.s32.totalorder %s423, 3
        %s425 = scalar_select %p424, %s423, 3
        %s426 = smul.addr %s425, 8
        %s427 = scalar_lea.vmem %s9, %s426
        %s428 = smul.u32 2, %s20
        %s429 = smul.u32 2, %s20
        %s430 = smul.u32 2, %s20
        %p431 = scmp.lt.s32.totalorder %s430, 3
        %s432 = scalar_select %p431, %s430, 3
        %s433 = smul.addr %s432, 4
        %s434 = scalar_lea.vmem %s2, %s433
        %s435 = smul.u32 2, %s20
        %s436 = smul.u32 2, %s20
        %p437 = scmp.lt.s32.totalorder %s436, 3
        %s438 = scalar_select %p437, %s436, 3
        %s439 = smul.addr %s438, 8
        %s440 = scalar_lea.vmem %s9, %s439
        %s441 = smul.u32 2, %s20
        %v442 = vld [vmem:[%s8] sm:$0xff]
        %s443 = smul.u32 %s20, 256
        %v444 = vlaneseq
        %v445 = vand.u32 %v444, 127
        %v446 = vadd.s32 %v445, 128
        %v447 = vstv %s443
        %v448 = vadd.s32 %v447, %v445
        %v449 = vadd.s32 %v447, %v446
        %v450 = vlaneseq
        %v451 = vshrl.u32 %v450, 7
        %v452 = vmul.u32 %v451, 256
        %vm453 = vcmp.ge.s32.totalorder %v448, %v452
        %vm454 = vcmp.ge.s32.totalorder %v449, %v452
        %v455 = vadd.s32 %v452, 256
        %vm456 = vcmp.lt.s32.totalorder %v448, %v455
        %vm457 = vcmp.lt.s32.totalorder %v449, %v455
        %vm458 = vmand %vm453, %vm456
        %vm459 = vmand %vm454, %vm457
        %v460 = vsel %vm458, 1, 0
        %v461 = vsel %vm459, 1, 0
        %v462 = vcvt.s32.f32 %v460
        %v463 = vcvt.s32.f32 %v461
        %v464 = vld [vmem:[%s3] sm:$0xff]
        %vm465 = vcmask 15360
        %v467 = vsel %vm465, %v464, 0
        %vm469 = vcmask 1041408
        %v471 = vsel %vm469, %v462, 0
        %v474 = vsel %vm469, %v463, 0
        %476 = vmatprep.subr.mxu0 %v474
        %477 = vmatpush1.msra.mxu0 %v471
        %478 = vmatprep.subr.mxu0 0.0
        %479 = vmatpush1.msra.mxu0 0.0
        %480 = vmatprep.subr.mxu0 0.0
        %481 = vmatpush1.msra.mxu0 0.0
        %482 = vmatprep.subr.mxu0 0.0
        %483 = vmatpush1.msra.mxu0 0.0
        %484 = vmatprep.subr.mxu0 0.0
        %485 = vmatpush1.msra.mxu0 0.0
        %486 = vmatprep.subr.mxu0 0.0
        %487 = vmatpush1.msra.mxu0 0.0
        %488 = vmatprep.subr.mxu0 0.0
        %489 = vmatpush1.msra.mxu0 0.0
        %490 = vmatprep.subr.mxu0 0.0
        %491 = vmatpush1.msra.mxu0 0.0
        %492 = vmatprep.subr.mxu0 0.0
        %493 = vmatpush1.msra.mxu0 0.0
        %494 = vmatprep.subr.mxu0 0.0
        %495 = vmatpush1.msra.mxu0 0.0
        %496 = vmatprep.subr.mxu0 0.0
        %497 = vmatpush1.msra.mxu0 0.0
        %498 = vmatprep.subr.mxu0 0.0
        %499 = vmatpush1.msra.mxu0 0.0
        %500 = vmatprep.subr.mxu0 0.0
        %501 = vmatpush1.msra.mxu0 0.0
        %502 = vmatprep.subr.mxu0 0.0
        %503 = vmatpush1.msra.mxu0 0.0
        %504 = vmatprep.subr.mxu0 0.0
        %505 = vmatpush1.msra.mxu0 0.0
        %506 = vmatprep.subr.mxu0 0.0
        %507 = vmatpush1.msra.mxu0 0.0
        %508 = vmatprep.subr.mxu0 0.0
        %509 = vmatpush1.msra.mxu0 0.0
        %510 = vmatprep.subr.mxu0 0.0
        %511 = vmatpush1.msra.mxu0 0.0
        %512 = vmatprep.subr.mxu0 0.0
        %513 = vmatpush1.msra.mxu0 0.0
        %514 = vmatprep.subr.mxu0 0.0
        %515 = vmatpush1.msra.mxu0 0.0
        %516 = vmatprep.subr.mxu0 0.0
        %517 = vmatpush1.msra.mxu0 0.0
        %518 = vmatprep.subr.mxu0 0.0
        %519 = vmatpush1.msra.mxu0 0.0
        %520 = vmatprep.subr.mxu0 0.0
        %521 = vmatpush1.msra.mxu0 0.0
        %522 = vmatprep.subr.mxu0 0.0
        %523 = vmatpush1.msra.mxu0 0.0
        %524 = vmatprep.subr.mxu0 0.0
        %525 = vmatpush1.msra.mxu0 0.0
        %526 = vmatprep.subr.mxu0 0.0
        %527 = vmatpush1.msra.mxu0 0.0
        %528 = vmatprep.subr.mxu0 0.0
        %529 = vmatpush1.msra.mxu0 0.0
        %530 = vmatprep.subr.mxu0 0.0
        %531 = vmatpush1.msra.mxu0 0.0
        %532 = vmatprep.subr.mxu0 0.0
        %533 = vmatpush1.msra.mxu0 0.0
        %534 = vmatprep.subr.mxu0 0.0
        %535 = vmatpush1.msra.mxu0 0.0
        %536 = vmatprep.subr.mxu0 0.0
        %537 = vmatpush1.msra.mxu0 0.0
        %538 = vmatprep.subr.mxu0 0.0
        %539 = vmatpush1.msra.mxu0 0.0
        %540 = vmatprep.mubr.f32.mxu0 0.0
        %541 = vmatmul.mubr.f32.gmra.mrb[0].mxu0 %v467
        %v542 = vpop.f32.mrb[0].mxu0
        %v543 = vadd.f32 0.0, %v542
        %v544 = vpop.f32.mrb[0].mxu0
        %v545 = vadd.f32 0.0, %v544
        %546 = vdwg.mxu0
        %v547 = vld [vmem:[%s4] sm:$0xff]
        %v548 = vld [vmem:[%s379] sm:$0xff]
        %v549 = vld [vmem:[%s379 + $0x8] sm:$0xff]
        %v550 = vld [vmem:[%s379 + $0x10] sm:$0xff]
        %v551 = vld [vmem:[%s379 + $0x18] sm:$0xff]
        %v552 = vld [vmem:[%s379 + $0x20] sm:$0xff]
        %v553 = vld [vmem:[%s379 + $0x28] sm:$0xff]
        %v554 = vld [vmem:[%s379 + $0x30] sm:$0xff]
        %v555 = vld [vmem:[%s379 + $0x38] sm:$0xff]
        %v556 = vld [vmem:[%s379 + $0x40] sm:$0xf]
        %v557 = vld [vmem:[%s379 + $0x48] sm:$0xf]
        %559 = vset.pattern.permute.xlu0 0
        %560 = vperm.xlu0 %559, %v442
        %v561 = vpop.permute.xlu0 %560
        %vm563 = vcmask 293888
        %v565 = vsel %vm563, %v547, 0
        %vm567 = vcmask 1043456
        %v569 = vsel %vm567, %v556, 0
        %v572 = vsel %vm567, %v557, 0
        %574 = vmatprep.subr.mxu0 %v549
        %575 = vmatpush1.msra.mxu0 %v548
        %576 = vmatprep.subr.mxu0 %v551
        %577 = vmatpush1.msra.mxu0 %v550
        %578 = vmatprep.subr.mxu0 %v553
        %579 = vmatpush1.msra.mxu0 %v552
        %580 = vmatprep.subr.mxu0 %v555
        %581 = vmatpush1.msra.mxu0 %v554
        %582 = vmatprep.subr.mxu0 %v572
        %583 = vmatpush1.msra.mxu0 %v569
        %584 = vmatprep.subr.mxu0 0.0
        %585 = vmatpush1.msra.mxu0 0.0
        %586 = vmatprep.subr.mxu0 0.0
        %587 = vmatpush1.msra.mxu0 0.0
        %588 = vmatprep.subr.mxu0 0.0
        %589 = vmatpush1.msra.mxu0 0.0
        %590 = vmatprep.subr.mxu0 0.0
        %591 = vmatpush1.msra.mxu0 0.0
        %592 = vmatprep.subr.mxu0 0.0
        %593 = vmatpush1.msra.mxu0 0.0
        %594 = vmatprep.subr.mxu0 0.0
        %595 = vmatpush1.msra.mxu0 0.0
        %596 = vmatprep.subr.mxu0 0.0
        %597 = vmatpush1.msra.mxu0 0.0
        %598 = vmatprep.subr.mxu0 0.0
        %599 = vmatpush1.msra.mxu0 0.0
        %600 = vmatprep.subr.mxu0 0.0
        %601 = vmatpush1.msra.mxu0 0.0
        %602 = vmatprep.subr.mxu0 0.0
        %603 = vmatpush1.msra.mxu0 0.0
        %604 = vmatprep.subr.mxu0 0.0
        %605 = vmatpush1.msra.mxu0 0.0
        %606 = vmatprep.subr.mxu0 0.0
        %607 = vmatpush1.msra.mxu0 0.0
        %608 = vmatprep.subr.mxu0 0.0
        %609 = vmatpush1.msra.mxu0 0.0
        %610 = vmatprep.subr.mxu0 0.0
        %611 = vmatpush1.msra.mxu0 0.0
        %612 = vmatprep.subr.mxu0 0.0
        %613 = vmatpush1.msra.mxu0 0.0
        %614 = vmatprep.subr.mxu0 0.0
        %615 = vmatpush1.msra.mxu0 0.0
        %616 = vmatprep.subr.mxu0 0.0
        %617 = vmatpush1.msra.mxu0 0.0
        %618 = vmatprep.subr.mxu0 0.0
        %619 = vmatpush1.msra.mxu0 0.0
        %620 = vmatprep.subr.mxu0 0.0
        %621 = vmatpush1.msra.mxu0 0.0
        %622 = vmatprep.subr.mxu0 0.0
        %623 = vmatpush1.msra.mxu0 0.0
        %624 = vmatprep.subr.mxu0 0.0
        %625 = vmatpush1.msra.mxu0 0.0
        %626 = vmatprep.subr.mxu0 0.0
        %627 = vmatpush1.msra.mxu0 0.0
        %628 = vmatprep.subr.mxu0 0.0
        %629 = vmatpush1.msra.mxu0 0.0
        %630 = vmatprep.subr.mxu0 0.0
        %631 = vmatpush1.msra.mxu0 0.0
        %632 = vmatprep.subr.mxu0 0.0
        %633 = vmatpush1.msra.mxu0 0.0
        %634 = vmatprep.subr.mxu0 0.0
        %635 = vmatpush1.msra.mxu0 0.0
        %636 = vmatprep.subr.mxu0 0.0
        %637 = vmatpush1.msra.mxu0 0.0
        %638 = vmatprep.mubr.f32.mxu0 0.0
        %639 = vmatmul.mubr.f32.gmra.mrb[0].mxu0 %v565
        %v640 = vpop.f32.mrb[0].mxu0
        %v641 = vadd.f32 %v561, %v640
        %v642 = vpop.f32.mrb[0].mxu0
        %v643 = vadd.f32 %v561, %v642
        %644 = vdwg.mxu0
        %v645 = vtanh.pop %v641
        %v646 = vtanh.pop %v643
        %v647 = vxor.u32 %v641, 2147483648
        %v648 = vxor.u32 %v643, 2147483648
        %v649 = vmul.f32 %v647, 1.442695
        %v650 = vpow.pop %v649
        %v651 = vmul.f32 %v648, 1.442695
        %v652 = vpow.pop %v651
        %v653 = vadd.f32 %v650, 1.0
        %v654 = vadd.f32 %v652, 1.0
        %v655 = vrcp.pop %v653
        %v656 = vmul.f32 1.0, %v655
        %v657 = vrcp.pop %v654
        %v658 = vmul.f32 1.0, %v657
        %v661 = vrot.slane %v656, 4
        %v662 = vrot.slane %v658, 4
        %v665 = vmul.f32 %v645, %v661
        %v666 = vmul.f32 %v646, %v662
        %v667 = vld [vmem:[%s6] sm:$0xff]
        %668 = vset.pattern.permute.xlu0 2
        %669 = vperm.xlu0 %668, %v442
        %v670 = vpop.permute.xlu0 %669
        %vm672 = vcmask 64512
        %v674 = vsel %vm672, %v667, 0
        %676 = vmatprep.subr.mxu0 %v643
        %677 = vmatpush1.msra.mxu0 %v641
        %678 = vmatprep.subr.mxu0 0.0
        %679 = vmatpush1.msra.mxu0 0.0
        %680 = vmatprep.subr.mxu0 0.0
        %681 = vmatpush1.msra.mxu0 0.0
        %682 = vmatprep.subr.mxu0 0.0
        %683 = vmatpush1.msra.mxu0 0.0
        %684 = vmatprep.subr.mxu0 0.0
        %685 = vmatpush1.msra.mxu0 0.0
        %686 = vmatprep.subr.mxu0 0.0
        %687 = vmatpush1.msra.mxu0 0.0
        %688 = vmatprep.subr.mxu0 0.0
        %689 = vmatpush1.msra.mxu0 0.0
        %690 = vmatprep.subr.mxu0 0.0
        %691 = vmatpush1.msra.mxu0 0.0
        %692 = vmatprep.subr.mxu0 0.0
        %693 = vmatpush1.msra.mxu0 0.0
        %694 = vmatprep.subr.mxu0 0.0
        %695 = vmatpush1.msra.mxu0 0.0
        %696 = vmatprep.subr.mxu0 0.0
        %697 = vmatpush1.msra.mxu0 0.0
        %698 = vmatprep.subr.mxu0 0.0
        %699 = vmatpush1.msra.mxu0 0.0
        %700 = vmatprep.subr.mxu0 0.0
        %701 = vmatpush1.msra.mxu0 0.0
        %702 = vmatprep.subr.mxu0 0.0
        %703 = vmatpush1.msra.mxu0 0.0
        %704 = vmatprep.subr.mxu0 0.0
        %705 = vmatpush1.msra.mxu0 0.0
        %706 = vmatprep.subr.mxu0 0.0
        %707 = vmatpush1.msra.mxu0 0.0
        %708 = vmatprep.subr.mxu0 0.0
        %709 = vmatpush1.msra.mxu0 0.0
        %710 = vmatprep.subr.mxu0 0.0
        %711 = vmatpush1.msra.mxu0 0.0
        %712 = vmatprep.subr.mxu0 0.0
        %713 = vmatpush1.msra.mxu0 0.0
        %714 = vmatprep.subr.mxu0 0.0
        %715 = vmatpush1.msra.mxu0 0.0
        %716 = vmatprep.subr.mxu0 0.0
        %717 = vmatpush1.msra.mxu0 0.0
        %718 = vmatprep.subr.mxu0 0.0
        %719 = vmatpush1.msra.mxu0 0.0
        %720 = vmatprep.subr.mxu0 0.0
        %721 = vmatpush1.msra.mxu0 0.0
        %722 = vmatprep.subr.mxu0 0.0
        %723 = vmatpush1.msra.mxu0 0.0
        %724 = vmatprep.subr.mxu0 0.0
        %725 = vmatpush1.msra.mxu0 0.0
        %726 = vmatprep.subr.mxu0 0.0
        %727 = vmatpush1.msra.mxu0 0.0
        %728 = vmatprep.subr.mxu0 0.0
        %729 = vmatpush1.msra.mxu0 0.0
        %730 = vmatprep.subr.mxu0 0.0
        %731 = vmatpush1.msra.mxu0 0.0
        %732 = vmatprep.subr.mxu0 0.0
        %733 = vmatpush1.msra.mxu0 0.0
        %734 = vmatprep.subr.mxu0 0.0
        %735 = vmatpush1.msra.mxu0 0.0
        %736 = vmatprep.subr.mxu0 0.0
        %737 = vmatpush1.msra.mxu0 0.0
        %738 = vmatprep.subr.mxu0 0.0
        %739 = vmatpush1.msra.mxu0 0.0
        %740 = vmatprep.mubr.f32.mxu0 0.0
        %741 = vmatmul.mubr.f32.gmra.mrb[0].mxu0 %v674
        %v742 = vpop.f32.mrb[0].mxu0
        %v743 = vadd.f32 %v670, %v742
        %v744 = vpop.f32.mrb[0].mxu0
        %v745 = vadd.f32 %v670, %v744
        %746 = vdwg.mxu0
        %v747 = vadd.f32 %v743, %v543
        %v748 = vadd.f32 %v745, %v545
        %v749 = vld [vmem:[%s5] sm:$0xff]
        %v750 = vld [vmem:[%s386] sm:$0xff]
        %v751 = vld [vmem:[%s386 + $0x8] sm:$0xff]
        %v752 = vld [vmem:[%s386 + $0x10] sm:$0xf]
        %v753 = vld [vmem:[%s386 + $0x18] sm:$0xf]
        %754 = vset.pattern.permute.xlu0 1
        %755 = vperm.xlu0 %754, %v442
        %v756 = vpop.permute.xlu0 %755
        %vm758 = vcmask 97280
        %v760 = vsel %vm758, %v749, 0
        %v763 = vsel %vm567, %v752, 0
        %v766 = vsel %vm567, %v753, 0
        %768 = vmatprep.subr.mxu0 %v751
        %769 = vmatpush1.msra.mxu0 %v750
        %770 = vmatprep.subr.mxu0 %v766
        %771 = vmatpush1.msra.mxu0 %v763
        %772 = vmatprep.subr.mxu0 0.0
        %773 = vmatpush1.msra.mxu0 0.0
        %774 = vmatprep.subr.mxu0 0.0
        %775 = vmatpush1.msra.mxu0 0.0
        %776 = vmatprep.subr.mxu0 0.0
        %777 = vmatpush1.msra.mxu0 0.0
        %778 = vmatprep.subr.mxu0 0.0
        %779 = vmatpush1.msra.mxu0 0.0
        %780 = vmatprep.subr.mxu0 0.0
        %781 = vmatpush1.msra.mxu0 0.0
        %782 = vmatprep.subr.mxu0 0.0
        %783 = vmatpush1.msra.mxu0 0.0
        %784 = vmatprep.subr.mxu0 0.0
        %785 = vmatpush1.msra.mxu0 0.0
        %786 = vmatprep.subr.mxu0 0.0
        %787 = vmatpush1.msra.mxu0 0.0
        %788 = vmatprep.subr.mxu0 0.0
        %789 = vmatpush1.msra.mxu0 0.0
        %790 = vmatprep.subr.mxu0 0.0
        %791 = vmatpush1.msra.mxu0 0.0
        %792 = vmatprep.subr.mxu0 0.0
        %793 = vmatpush1.msra.mxu0 0.0
        %794 = vmatprep.subr.mxu0 0.0
        %795 = vmatpush1.msra.mxu0 0.0
        %796 = vmatprep.subr.mxu0 0.0
        %797 = vmatpush1.msra.mxu0 0.0
        %798 = vmatprep.subr.mxu0 0.0
        %799 = vmatpush1.msra.mxu0 0.0
        %800 = vmatprep.subr.mxu0 0.0
        %801 = vmatpush1.msra.mxu0 0.0
        %802 = vmatprep.subr.mxu0 0.0
        %803 = vmatpush1.msra.mxu0 0.0
        %804 = vmatprep.subr.mxu0 0.0
        %805 = vmatpush1.msra.mxu0 0.0
        %806 = vmatprep.subr.mxu0 0.0
        %807 = vmatpush1.msra.mxu0 0.0
        %808 = vmatprep.subr.mxu0 0.0
        %809 = vmatpush1.msra.mxu0 0.0
        %810 = vmatprep.subr.mxu0 0.0
        %811 = vmatpush1.msra.mxu0 0.0
        %812 = vmatprep.subr.mxu0 0.0
        %813 = vmatpush1.msra.mxu0 0.0
        %814 = vmatprep.subr.mxu0 0.0
        %815 = vmatpush1.msra.mxu0 0.0
        %816 = vmatprep.subr.mxu0 0.0
        %817 = vmatpush1.msra.mxu0 0.0
        %818 = vmatprep.subr.mxu0 0.0
        %819 = vmatpush1.msra.mxu0 0.0
        %820 = vmatprep.subr.mxu0 0.0
        %821 = vmatpush1.msra.mxu0 0.0
        %822 = vmatprep.subr.mxu0 0.0
        %823 = vmatpush1.msra.mxu0 0.0
        %824 = vmatprep.subr.mxu0 0.0
        %825 = vmatpush1.msra.mxu0 0.0
        %826 = vmatprep.subr.mxu0 0.0
        %827 = vmatpush1.msra.mxu0 0.0
        %828 = vmatprep.subr.mxu0 0.0
        %829 = vmatpush1.msra.mxu0 0.0
        %830 = vmatprep.subr.mxu0 0.0
        %831 = vmatpush1.msra.mxu0 0.0
        %832 = vmatprep.mubr.f32.mxu0 0.0
        %833 = vmatmul.mubr.f32.gmra.mrb[0].mxu0 %v760
        %v834 = vpop.f32.mrb[0].mxu0
        %v835 = vadd.f32 %v756, %v834
        %v836 = vpop.f32.mrb[0].mxu0
        %v837 = vadd.f32 %v756, %v836
        %838 = vdwg.mxu0
        %v839 = vadd.f32 %v835, %v747
        %v840 = vadd.f32 %v837, %v748
        %v841 = vadd.f32 %v839, %v543
        %v842 = vadd.f32 %v840, %v545
        %v843 = vtanh.pop %v841
        %v844 = vtanh.pop %v842
        %v845 = vxor.u32 %v841, 2147483648
        %v846 = vxor.u32 %v842, 2147483648
        %v847 = vmul.f32 %v845, 1.442695
        %v848 = vpow.pop %v847
        %v849 = vmul.f32 %v846, 1.442695
        %v850 = vpow.pop %v849
        %v851 = vadd.f32 %v848, 1.0
        %v852 = vadd.f32 %v850, 1.0
        %v853 = vrcp.pop %v851
        %v854 = vmul.f32 1.0, %v853
        %v855 = vrcp.pop %v852
        %v856 = vmul.f32 1.0, %v855
        %v859 = vrot.slane %v854, 4
        %v860 = vrot.slane %v856, 4
        %v863 = vmul.f32 %v843, %v859
        %v864 = vmul.f32 %v844, %v860
        %v865 = vld [vmem:[%s7] sm:$0xf]
        %866 = vset.pattern.permute.xlu0 3
        %867 = vperm.xlu0 %866, %v442
        %v868 = vpop.permute.xlu0 %867
        %vm870 = vcmask 31744
        %v872 = vsel %vm870, %v865, 0
        %v875 = vsel %vm567, %v863, 0
        %v878 = vsel %vm567, %v864, 0
        %880 = vmatprep.subr.mxu0 %v878
        %881 = vmatpush1.msra.mxu0 %v875
        %882 = vmatprep.subr.mxu0 0.0
        %883 = vmatpush1.msra.mxu0 0.0
        %884 = vmatprep.subr.mxu0 0.0
        %885 = vmatpush1.msra.mxu0 0.0
        %886 = vmatprep.subr.mxu0 0.0
        %887 = vmatpush1.msra.mxu0 0.0
        %888 = vmatprep.subr.mxu0 0.0
        %889 = vmatpush1.msra.mxu0 0.0
        %890 = vmatprep.subr.mxu0 0.0
        %891 = vmatpush1.msra.mxu0 0.0
        %892 = vmatprep.subr.mxu0 0.0
        %893 = vmatpush1.msra.mxu0 0.0
        %894 = vmatprep.subr.mxu0 0.0
        %895 = vmatpush1.msra.mxu0 0.0
        %896 = vmatprep.subr.mxu0 0.0
        %897 = vmatpush1.msra.mxu0 0.0
        %898 = vmatprep.subr.mxu0 0.0
        %899 = vmatpush1.msra.mxu0 0.0
        %900 = vmatprep.subr.mxu0 0.0
        %901 = vmatpush1.msra.mxu0 0.0
        %902 = vmatprep.subr.mxu0 0.0
        %903 = vmatpush1.msra.mxu0 0.0
        %904 = vmatprep.subr.mxu0 0.0
        %905 = vmatpush1.msra.mxu0 0.0
        %906 = vmatprep.subr.mxu0 0.0
        %907 = vmatpush1.msra.mxu0 0.0
        %908 = vmatprep.subr.mxu0 0.0
        %909 = vmatpush1.msra.mxu0 0.0
        %910 = vmatprep.subr.mxu0 0.0
        %911 = vmatpush1.msra.mxu0 0.0
        %912 = vmatprep.subr.mxu0 0.0
        %913 = vmatpush1.msra.mxu0 0.0
        %914 = vmatprep.subr.mxu0 0.0
        %915 = vmatpush1.msra.mxu0 0.0
        %916 = vmatprep.subr.mxu0 0.0
        %917 = vmatpush1.msra.mxu0 0.0
        %918 = vmatprep.subr.mxu0 0.0
        %919 = vmatpush1.msra.mxu0 0.0
        %920 = vmatprep.subr.mxu0 0.0
        %921 = vmatpush1.msra.mxu0 0.0
        %922 = vmatprep.subr.mxu0 0.0
        %923 = vmatpush1.msra.mxu0 0.0
        %924 = vmatprep.subr.mxu0 0.0
        %925 = vmatpush1.msra.mxu0 0.0
        %926 = vmatprep.subr.mxu0 0.0
        %927 = vmatpush1.msra.mxu0 0.0
        %928 = vmatprep.subr.mxu0 0.0
        %929 = vmatpush1.msra.mxu0 0.0
        %930 = vmatprep.subr.mxu0 0.0
        %931 = vmatpush1.msra.mxu0 0.0
        %932 = vmatprep.subr.mxu0 0.0
        %933 = vmatpush1.msra.mxu0 0.0
        %934 = vmatprep.subr.mxu0 0.0
        %935 = vmatpush1.msra.mxu0 0.0
        %936 = vmatprep.subr.mxu0 0.0
        %937 = vmatpush1.msra.mxu0 0.0
        %938 = vmatprep.subr.mxu0 0.0
        %939 = vmatpush1.msra.mxu0 0.0
        %940 = vmatprep.subr.mxu0 0.0
        %941 = vmatpush1.msra.mxu0 0.0
        %942 = vmatprep.subr.mxu0 0.0
        %943 = vmatpush1.msra.mxu0 0.0
        %944 = vmatprep.mubr.f32.mxu0 0.0
        %945 = vmatmul.mubr.f32.gmra.mrb[0].mxu0 %v872
        %v946 = vpop.f32.mrb[0].mxu0
        %v947 = vadd.f32 %v868, %v946
        %v948 = vpop.f32.mrb[0].mxu0
        %v949 = vadd.f32 %v868, %v948
        %950 = vdwg.mxu0
        %v951 = vld [vmem:[%s434] sm:$0xff]
        %v953 = vcombine.high %v951, %v951
        %v955 = vadd.f32 %v947, %v951
        %v956 = vadd.f32 %v949, %v953
        %v959 = vrot.slane %v955, 4
        %v960 = vrot.slane %v956, 4
        %v963 = vsel %vm567, %v665, %v959
        %v964 = vsel %vm567, %v666, %v960
        %965 = vst [vmem:[%s440] sm:$0xff] %v963
        %966 = vst [vmem:[%s440 + $0x8] sm:$0xff] %v964
        %s967 = smul.u32 2, %s20
        %p968 = scmp.lt.s32.totalorder %s967, 3
        %s969 = scalar_select %p968, %s967, 3
        %s970 = smul.addr %s969, 8
        %s971 = scalar_lea.vmem %s9, %s970
        // Predicated region
        $region103: #{_lambda_.1} parent=93 // pred_check
          %p972 = pneg %p242
        $region104: #{_lambda_.1} parent=93 // pred_check_branch
          %974 = sbr.rel (%p972) target = $region106
        $region105: #{_lambda_.1} parent=93 // pred_region
          %s975 = smul.u32 2, %s20
        $region106: #{_lambda_.1} parent=93 // pred_fallthru
          _
      $region94: #{_lambda_.1} parent=5 // pred_fallthru
        _
      %p976 = scmp.le.s32.totalorder 2, %s15
      // Predicated region
      $region107: #{_lambda_.1} parent=5 // pred_check
        %p977 = pneg %p976
      $region108: #{_lambda_.1} parent=5 // pred_check_branch
        %979 = sbr.rel (%p977) target = $region110
      $region109: #{_lambda_.1} parent=5 // pred_region
        %s980 = ssub.s32 %s15, 2
        // Predicated region
        $region111: #{_lambda_.1} parent=109 // pred_check
          %p981 = pneg %p248
        $region112: #{_lambda_.1} parent=109 // pred_check_branch
          %983 = sbr.rel (%p981) target = $region114
        $region113: #{_lambda_.1} parent=109 // pred_region
          %s984 = smul.u32 2, %s21
          %p985 = scmp.lt.s32.totalorder %s984, 3
          %s986 = scalar_select %p985, %s984, 3
          %s987 = smul.addr %s986, 8
          %s988 = scalar_lea.vmem %s9, %s987
        $region114: #{_lambda_.1} parent=109 // pred_fallthru
          _
      $region110: #{_lambda_.1} parent=5 // pred_fallthru
        _
    $region6: #{_lambda_.1} parent=1 // loop_footer
      %s19 = sadd.s32 1, %s15
    $region7: #{_lambda_.1} parent=1 // loop_footer_branch
      %14 = sbr.rel target = $region3
    $region8: #{_lambda_.1} parent=1 // loop_exit
      _

</llo_original>
